<compile_context>
chip_gen: v6e
topology: v6e:2x2x1
jax: 0.10.0
libtpu: 0.0.40
codegen_flags: <defaults>
</compile_context>

<pallas_src>
import functools

import jax
import jax.numpy as jnp
from jax import lax
from jax.experimental import pallas as pl
from jax.experimental.pallas import tpu as pltpu


def _round_up(x, m):
    return ((x + m - 1) // m) * m


def _pick_cout_tile(c_pad, target):
    """Largest multiple of 128 that divides c_pad and is <= target."""
    target = max(128, min(int(target), c_pad))
    best, t = 128, 128
    while t <= target:
        if c_pad % t == 0:
            best = t
        t += 128
    return best


def _causal_conv_kernel(x_ref, w_ref, b_ref, o_ref, carry_ref, *,
                        K, dilation, padding, fuse_taps):
    # x_ref:  (1, TT, C_in)       current input time tile
    # w_ref:  (K*C_in, TN)        w[j*C_in+ci, co] = W_pt[co, ci, K-1-j]
    # b_ref:  (1, TN)             f32 bias (zero-padded)
    # o_ref:  (1, TT, TN)
    # carry:  (padding, C_in)     last `padding` rows of the previous time tile
    i = pl.program_id(2)
    TT = x_ref.shape[1]
    C_in = x_ref.shape[2]

    x_tile = x_ref[0]                                            # (TT, C_in)

    if padding > 0:
        @pl.when(i == 0)
        def _():
            carry_ref[...] = jnp.zeros_like(carry_ref)
        full = jnp.concatenate([carry_ref[...], x_tile], axis=0)  # (P+TT, C_in)
    else:
        full = x_tile

    # Tap j needs rows [i*TT - j*d, i*TT + TT - j*d) = full[P - j*d : P - j*d + TT).
    taps = [full[padding - j * dilation: padding - j * dilation + TT, :]
            for j in range(K)]

    if fuse_taps and K > 1:
        # Small C_in: one lane/contraction-dense MXU call on the im2col slab.
        slab = jnp.concatenate(taps, axis=1)                      # (TT, K*C_in)
        acc = jnp.dot(slab, w_ref[...], preferred_element_type=jnp.float32)
    else:
        acc = jnp.dot(taps[0], w_ref[0:C_in, :],
                      preferred_element_type=jnp.float32)
        for j in range(1, K):
            acc += jnp.dot(taps[j], w_ref[j * C_in:(j + 1) * C_in, :],
                           preferred_element_type=jnp.float32)

    o_ref[0] = (acc + b_ref[...].astype(jnp.float32)).astype(o_ref.dtype)

    if padding > 0:
        # Hand the halo to the next time tile of this (batch, C_out-tile).
        carry_ref[...] = x_tile[TT - padding:, :]


def causal_conv1d(x, weight_pt, bias, *, kernel_size, dilation=1,
                  time_tile=256, cout_tile=512, compute_dtype=None):
    """Causal dilated conv1d.

    Args:
      x:         [B, T, C_in] float array (same layout as the module forward).
      weight_pt: [C_out, C_in, K] (PyTorch Conv1d weight layout).
      bias:      [C_out].
      time_tile: target number of output time rows per grid step.
      cout_tile: target C_out tile width (multiple of 128).
      compute_dtype: e.g. jnp.bfloat16 to feed the MXU bf16 (f32 accumulate).
    Returns:
      [B, T, C_out] in x.dtype.
    """
    B, T, C_in = x.shape
    C_out, C_in_w, K = weight_pt.shape
    assert C_in_w == C_in and K == kernel_size
    padding = (K - 1) * dilation
    out_dtype = x.dtype
    compute_dtype = compute_dtype or x.dtype

    # ---- tile sizes -------------------------------------------------------
    TT = min(int(time_tile), max(T, 8))
    TT = max(TT, padding, 8)
    TT = _round_up(TT, 8)
    T_pad = _round_up(T, TT)

    C_out_pad = _round_up(C_out, 128)          # lane-dense output stores
    TN = _pick_cout_tile(C_out_pad, cout_tile)

    # ---- glue (parameter-sized work; only ragged T needs an activation pad) -
    if T_pad != T:
        x = jnp.pad(x, ((0, 0), (0, T_pad - T), (0, 0)))  # trailing zeros only
    x = x.astype(compute_dtype)

    # w2[j*C_in + ci, co] = W_pt[co, ci, K-1-j]  (flip + transpose, fused taps)
    w2 = jnp.transpose(weight_pt[:, :, ::-1], (2, 1, 0)).reshape(K * C_in, C_out)
    w2 = jnp.pad(w2, ((0, 0), (0, C_out_pad - C_out))).astype(compute_dtype)
    b2 = jnp.pad(bias, (0, C_out_pad - C_out)).reshape(1, C_out_pad)
    b2 = b2.astype(jnp.float32)

    fuse_taps = C_in < 128
    grid = (B, C_out_pad // TN, T_pad // TT)

    kernel = functools.partial(
        _causal_conv_kernel, K=K, dilation=dilation, padding=padding,
        fuse_taps=fuse_taps)

    # ---- VMEM budget + cost hint -----------------------------------------
    csize = jnp.dtype(compute_dtype).itemsize
    osize = jnp.dtype(out_dtype).itemsize
    x_blk = TT * C_in * csize
    w_blk = K * C_in * TN * csize
    o_blk = TT * TN * osize
    vmem_est = 2 * (x_blk + w_blk + TN * 4 + o_blk) \
        + max(padding, 1) * C_in * csize + (4 << 20)
    vmem_limit = int(min(max(vmem_est, 32 << 20), 64 << 20))

    cost = pl.CostEstimate(
        flops=2 * B * T_pad * K * C_in * C_out_pad,
        transcendentals=0,
        bytes_accessed=int(B * T_pad * C_in * csize + K * C_in * C_out_pad * csize
                           + C_out_pad * 4 + B * T_pad * C_out_pad * osize))

    y = pl.pallas_call(
        kernel,
        out_shape=jax.ShapeDtypeStruct((B, T_pad, C_out_pad), out_dtype),
        grid_spec=pltpu.PrefetchScalarGridSpec(
            num_scalar_prefetch=0,
            grid=grid,
            in_specs=[
                pl.BlockSpec((1, TT, C_in), lambda b, n, i: (b, i, 0)),
                pl.BlockSpec((K * C_in, TN), lambda b, n, i: (0, n)),
                pl.BlockSpec((1, TN), lambda b, n, i: (0, n)),
            ],
            out_specs=pl.BlockSpec((1, TT, TN), lambda b, n, i: (b, i, n)),
            scratch_shapes=[pltpu.VMEM((max(padding, 1), C_in), compute_dtype)],
        ),
        compiler_params=pltpu.CompilerParams(
            dimension_semantics=("parallel", "parallel", "arbitrary"),
            vmem_limit_bytes=vmem_limit),
        cost_estimate=cost,
    )(x, w2, b2)

    return y[:, :T, :C_out]


def _reference(x, weight_pt, bias, dilation, padding):
    # Independent reference via lax.conv_general_dilated (NWC / WIO / NWC);
    # left-only padding == causal conv.
    w_wio = jnp.transpose(weight_pt, (2, 1, 0))  # [K, C_in, C_out]
    y = lax.conv_general_dilated(
        x, w_wio,
        window_strides=(1,),
        padding=[(padding, 0)],
        rhs_dilation=(dilation,),
        dimension_numbers=("NWC", "WIO", "NWC"))
    return y + bias[None, None, :]


if __name__ == "__main__":
    key = jax.random.PRNGKey(0)

    # (B, T, C_in, C_out, K, d, time_tile, cout_tile, compute_dtype, tol)
    configs = [
        # Primary small config consistent with the module forward, f32.
        (2, 16, 4, 8, 3, 2, 256, 512, jnp.float32, 1e-3),
        # Same shapes, bf16 MXU feed (f32 accumulate).
        (2, 16, 4, 8, 3, 2, 256, 512, jnp.bfloat16, 2e-2),
        # Multiple time tiles + ragged T: exercises the halo carry path.
        (2, 20, 4, 8, 3, 2, 8, 512, jnp.float32, 1e-3),
        # Multiple C_out tiles (C_out_pad=256, TN=128) + carry.
        (1, 24, 8, 130, 2, 3, 8, 128, jnp.float32, 1e-3),
    ]

    for (B, T, C_in, C_out, K, d, tt, ct, cdtype, tol) in configs:
        key, kx, kw, kb = jax.random.split(key, 4)
        x = jax.random.normal(kx, (B, T, C_in), dtype=jnp.float32)
        bound = (C_in * K) ** -0.5  # PyTorch Conv1d default-style uniform bound
        weight_pt = jax.random.uniform(
            kw, (C_out, C_in, K), jnp.float32, minval=-bound, maxval=bound)
        bias = jax.random.uniform(
            kb, (C_out,), jnp.float32, minval=-bound, maxval=bound)

        y = causal_conv1d(x, weight_pt, bias, kernel_size=K, dilation=d,
                          time_tile=tt, cout_tile=ct, compute_dtype=cdtype)
        y = jax.block_until_ready(y)

        if cdtype == jnp.bfloat16:
            xr = x.astype(jnp.bfloat16).astype(jnp.float32)
            wr = weight_pt.astype(jnp.bfloat16).astype(jnp.float32)
        else:
            xr, wr = x, weight_pt
        y_ref = _reference(xr, wr, bias, d, (K - 1) * d)

        assert y.shape == (B, T, C_out)
        err = float(jnp.max(jnp.abs(y.astype(jnp.float32) - y_ref)))
        assert err <= tol, f"mismatch vs reference: max_err={err} > {tol}"

    print("KERNEL_OK")
</pallas_src>

<mosaic_0001>
module attributes {stable_mosaic.version = 11 : i64} {
  func.func @_causal_conv_kernel(%arg0: i32, %arg1: i32, %arg2: i32, %arg3: memref<1x16x4xf32, #tpu.memory_space<vmem>>, %arg4: memref<12x128xf32, #tpu.memory_space<vmem>>, %arg5: memref<1x128xf32, #tpu.memory_space<vmem>>, %arg6: memref<1x16x128xf32, #tpu.memory_space<vmem>>, %arg7: memref<4x4xf32, #tpu.memory_space<vmem>>) attributes {dimension_semantics = [#tpu.dimension_semantics<parallel>, #tpu.dimension_semantics<parallel>, #tpu.dimension_semantics<arbitrary>], iteration_bounds = array<i64: 2, 1, 1>, scalar_prefetch = 0 : i64, scratch_operands = 1 : i64, tpu.core_type = #tpu.core_type<tc>, window_params = [{transform_indices = @transform_0, window_bounds = array<i64: 1, 16, 4>}, {transform_indices = @transform_1, window_bounds = array<i64: 12, 128>}, {transform_indices = @transform_2, window_bounds = array<i64: 1, 128>}, {transform_indices = @transform_3, window_bounds = array<i64: 1, 16, 128>}]} {
    %c0 = arith.constant 0 : index
    %c0_0 = arith.constant 0 : index
    %c0_1 = arith.constant 0 : index
    %0 = vector.load %arg3[%c0, %c0_0, %c0_1] : memref<1x16x4xf32, #tpu.memory_space<vmem>>, vector<1x16x4xf32>
    %1 = vector.shape_cast %0 : vector<1x16x4xf32> to vector<16x4xf32>
    %c0_i32 = arith.constant 0 : i32
    %2 = arith.cmpi eq, %arg2, %c0_i32 : i32
    %3 = arith.extui %2 : i1 to i32
    %c0_i32_2 = arith.constant 0 : i32
    %4 = arith.cmpi ne, %3, %c0_i32_2 : i32
    scf.if %4 {
      %cst_14 = arith.constant 0.000000e+00 : f32
      %21 = vector.broadcast %cst_14 : f32 to vector<4x4xf32>
      %c0_15 = arith.constant 0 : index
      %c0_16 = arith.constant 0 : index
      %22 = vector.load %arg7[%c0_15, %c0_16] : memref<4x4xf32, #tpu.memory_space<vmem>>, vector<4x4xf32>
      tpu.vector_store %arg7[%c0_15, %c0_16], %21 {strides = array<i32>} : memref<4x4xf32, #tpu.memory_space<vmem>>, vector<4x4xf32>,
    } else {
    }
    %c0_3 = arith.constant 0 : index
    %c0_4 = arith.constant 0 : index
    %5 = vector.load %arg7[%c0_3, %c0_4] : memref<4x4xf32, #tpu.memory_space<vmem>>, vector<4x4xf32>
    %6 = tpu.concatenate %5, %1 in 0 : vector<4x4xf32>, vector<16x4xf32> -> vector<20x4xf32>
    %7 = vector.extract_strided_slice %6 {offsets = [4, 0], sizes = [16, 4], strides = [1, 1]} : vector<20x4xf32> to vector<16x4xf32>
    %8 = vector.extract_strided_slice %6 {offsets = [2, 0], sizes = [16, 4], strides = [1, 1]} : vector<20x4xf32> to vector<16x4xf32>
    %9 = vector.extract_strided_slice %6 {offsets = [0, 0], sizes = [16, 4], strides = [1, 1]} : vector<20x4xf32> to vector<16x4xf32>
    %10 = tpu.concatenate %7, %8, %9 in 1 : vector<16x4xf32>, vector<16x4xf32>, vector<16x4xf32> -> vector<16x12xf32>
    %c0_5 = arith.constant 0 : index
    %c0_6 = arith.constant 0 : index
    %11 = vector.load %arg4[%c0_5, %c0_6] : memref<12x128xf32, #tpu.memory_space<vmem>>, vector<12x128xf32>
    %cst = arith.constant dense<0.000000e+00> : vector<16x128xf32>
    %12 = tpu.matmul %10, %11, %cst {dimension_numbers = #tpu.dot_dimension_numbers<[1], [0], [0], [1], [0, 0, 1, 1], [], []>} : vector<16x12xf32>, vector<12x128xf32>, vector<16x128xf32> -> vector<16x128xf32>
    %c0_7 = arith.constant 0 : index
    %c0_8 = arith.constant 0 : index
    %13 = vector.load %arg5[%c0_7, %c0_8] : memref<1x128xf32, #tpu.memory_space<vmem>>, vector<1x128xf32>
    %14 = vector.broadcast %13 : vector<1x128xf32> to vector<16x128xf32>
    %15 = arith.addf %12, %14 : vector<16x128xf32>
    %c0_9 = arith.constant 0 : index
    %c0_10 = arith.constant 0 : index
    %c0_11 = arith.constant 0 : index
    %16 = vector.load %arg6[%c0_9, %c0_10, %c0_11] : memref<1x16x128xf32, #tpu.memory_space<vmem>>, vector<1x16x128xf32>
    %17 = vector.shape_cast %16 : vector<1x16x128xf32> to vector<16x128xf32>
    %18 = vector.shape_cast %15 : vector<16x128xf32> to vector<1x16x128xf32>
    tpu.vector_store %arg6[%c0_9, %c0_10, %c0_11], %18 {strides = array<i32>} : memref<1x16x128xf32, #tpu.memory_space<vmem>>, vector<1x16x128xf32>,
    %19 = vector.extract_strided_slice %1 {offsets = [12, 0], sizes = [4, 4], strides = [1, 1]} : vector<16x4xf32> to vector<4x4xf32>
    %c0_12 = arith.constant 0 : index
    %c0_13 = arith.constant 0 : index
    %20 = vector.load %arg7[%c0_12, %c0_13] : memref<4x4xf32, #tpu.memory_space<vmem>>, vector<4x4xf32>
    tpu.vector_store %arg7[%c0_12, %c0_13], %19 {strides = array<i32>} : memref<4x4xf32, #tpu.memory_space<vmem>>, vector<4x4xf32>,
    return
  }
  func.func @transform_0(%arg0: i32, %arg1: i32, %arg2: i32) -> (i32, i32, i32) {
    %c0_i32 = arith.constant 0 : i32
    %c0_i32_0 = arith.constant 0 : i32
    return %arg0, %arg2, %c0_i32 : i32, i32, i32
  }
  func.func @transform_1(%arg0: i32, %arg1: i32, %arg2: i32) -> (i32, i32) {
    %c0_i32 = arith.constant 0 : i32
    %c0_i32_0 = arith.constant 0 : i32
    return %c0_i32, %arg1 : i32, i32
  }
  func.func @transform_2(%arg0: i32, %arg1: i32, %arg2: i32) -> (i32, i32) {
    %c0_i32 = arith.constant 0 : i32
    %c0_i32_0 = arith.constant 0 : i32
    return %c0_i32, %arg1 : i32, i32
  }
  func.func @transform_3(%arg0: i32, %arg1: i32, %arg2: i32) -> (i32, i32, i32) {
    %c0_i32 = arith.constant 0 : i32
    return %arg0, %arg2, %arg1 : i32, i32, i32
  }
}

</mosaic_0001>

<llo_original>
// kernel: tpu_custom_call.1
$region0: #{tpu_custom_call.1}
  #allocation0 [shape = 'u32[]', space=smem, size = 0x4, offset = 0x4, fixed_abs, tag = 'smem constant byte address 0x4 - core index']
  #allocation1 [shape = 'u32[144,128]{1,0:T(1,128)}', space=vmem, size = 0x12000, scoped, tag = 'internal scratch']
  #allocation2 [shape = 'f32[4,4]{1,0:T(4,128)}', space=vmem, size = 0x800, scoped, tag = 'scratch operand']
  %s0 = inlined_call_operand.vmem [shape: f32[2,16,4], index: 0, kind: input, shape index: {}]
  %s1 = inlined_call_operand.vmem [shape: f32[12,128], index: 1, kind: input, shape index: {}]
  %s2 = inlined_call_operand.vmem [shape: f32[1,128], index: 2, kind: input, shape index: {}]
  %s3 = inlined_call_operand.hbm [shape: f32[2,16,128], index: 3, kind: output, shape index: {}]
  %s4 = sld [smem:[#allocation0]]
  $region49: #{tpu_custom_call.1} parent=0
    _
  %s6 = ssub.s32 1, %s4
  %s7 = scalar_select 0, %s6, %s4
  $region1: #{tpu_custom_call.1} parent=0
    #allocation3 [shape = 'u8[16384]{0}', space=vmem, size = 0x4000, scoped, tag = 'output window, operand 0']
    #allocation4 [shape = 's32[2]{0}', space=sflag, size = 0x8, scoped, tag = 'scoped memory for tpu_custom_call.1']
    %8 = vsyncpa [#allocation4], 0
    %s9 = scalar_lea.sflag [#allocation4], 1
    %10 = vsyncpa %s9, 0
    loop: start=0, step=1, limit=4
    $region2: #{tpu_custom_call.1} parent=1 // loop_pre_header
      _
    $region3: #{tpu_custom_call.1} parent=1 // loop_header
      %s12 = sphi 0, %s16
      %p13 = scmp.ge.s32.totalorder %s12, 4
      %s19 = sphi 0, %s38
      %s20 = sphi 0, %s34
      %s21 = sphi 0, %s30
      %s22 = sphi 0, %s19
      %s23 = sphi 0, %s20
      %s24 = sphi 0, %s21
      %s25 = sphi 0, %s22
      %s26 = sphi 0, %s23
      %s27 = sphi 0, %s24
      %s43 = sphi 0, %s45
      %s46 = sphi 0, %s43
      %s47 = sphi 0, %s46
      %s63 = sphi 0, %s47
      %s69 = sphi 0, %s71
      %s72 = sphi 0, %s69
      %s73 = sphi 0, %s72
      %s89 = sphi 0, %s73
      %s95 = sphi 0, %s97
      %s98 = sphi 0, %s95
      %s99 = sphi 0, %s98
      %s115 = sphi 0, %s99
      %s125 = sphi 0, %s127
      %s128 = sphi 0, %s125
      %s129 = sphi 0, %s128
      %s145 = sphi 0, %s129
    $region4: #{tpu_custom_call.1} parent=1 // loop_header_branch
      %15 = sbr.rel (%p13) target = $region8
    $region5: #{tpu_custom_call.1} parent=1 // loop_body
      %s17 = ssub.s32 %s12, 1
      %s18 = ssub.s32 %s12, 2
      %s28 = sadd.s32 1, %s21
      %p29 = scmp.ge.s32.totalorder %s28, 1
      %s30 = scalar_select %p29, 0, %s28
      %s31 = sadd.s32 1, %s20
      %s32 = scalar_select %p29, %s31, %s20
      %p33 = scmp.ge.s32.totalorder %s32, 1
      %s34 = scalar_select %p33, 0, %s32
      %s35 = sadd.s32 1, %s19
      %s36 = scalar_select %p33, %s35, %s19
      %p37 = scmp.ge.s32.totalorder %s36, 2
      %s38 = scalar_select %p37, 0, %s36
      %s39 = ssub.s32 %s19, %s38
      %s40 = ssub.s32 %s21, %s30
      %s41 = sor.u32 %s39, %s40
      %p42 = scmp.eq.s32.totalorder %s41, 0
      %s44 = sadd.s32 %s43, 1
      %s45 = scalar_select %p42, %s43, %s44
      %p48 = pneg %p42
      %p49 = scmp.eq.s32.totalorder %s12, 1
      %p50 = por %p48, %p49
      %p51 = scmp.ne.s32.totalorder %s43, %s46
      %p52 = scmp.eq.s32.totalorder %s12, 0
      %p53 = por %p51, %p52
      %p54 = scmp.ne.s32.totalorder %s43, %s46
      %p55 = scmp.eq.s32.totalorder %s17, 1
      %p56 = por %p54, %p55
      %p57 = scmp.ne.s32.totalorder %s46, %s47
      %p58 = scmp.eq.s32.totalorder %s17, 0
      %p59 = por %p57, %p58
      %p60 = scmp.ne.s32.totalorder %s46, %s47
      %p61 = scmp.eq.s32.totalorder %s18, 1
      %p62 = por %p60, %p61
      %p64 = scmp.ne.s32.totalorder %s47, %s63
      %p65 = scmp.eq.s32.totalorder %s18, 0
      %p66 = por %p64, %p65
      %s67 = ssub.s32 %s20, %s34
      %p68 = scmp.eq.s32.totalorder %s67, 0
      %s70 = sadd.s32 %s69, 1
      %s71 = scalar_select %p68, %s69, %s70
      %p74 = pneg %p68
      %p75 = scmp.eq.s32.totalorder %s12, 1
      %p76 = por %p74, %p75
      %p77 = scmp.ne.s32.totalorder %s69, %s72
      %p78 = scmp.eq.s32.totalorder %s12, 0
      %p79 = por %p77, %p78
      %p80 = scmp.ne.s32.totalorder %s69, %s72
      %p81 = scmp.eq.s32.totalorder %s17, 1
      %p82 = por %p80, %p81
      %p83 = scmp.ne.s32.totalorder %s72, %s73
      %p84 = scmp.eq.s32.totalorder %s17, 0
      %p85 = por %p83, %p84
      %p86 = scmp.ne.s32.totalorder %s72, %s73
      %p87 = scmp.eq.s32.totalorder %s18, 1
      %p88 = por %p86, %p87
      %p90 = scmp.ne.s32.totalorder %s73, %s89
      %p91 = scmp.eq.s32.totalorder %s18, 0
      %p92 = por %p90, %p91
      %s93 = ssub.s32 %s20, %s34
      %p94 = scmp.eq.s32.totalorder %s93, 0
      %s96 = sadd.s32 %s95, 1
      %s97 = scalar_select %p94, %s95, %s96
      %p100 = pneg %p94
      %p101 = scmp.eq.s32.totalorder %s12, 1
      %p102 = por %p100, %p101
      %p103 = scmp.ne.s32.totalorder %s95, %s98
      %p104 = scmp.eq.s32.totalorder %s12, 0
      %p105 = por %p103, %p104
      %p106 = scmp.ne.s32.totalorder %s95, %s98
      %p107 = scmp.eq.s32.totalorder %s17, 1
      %p108 = por %p106, %p107
      %p109 = scmp.ne.s32.totalorder %s98, %s99
      %p110 = scmp.eq.s32.totalorder %s17, 0
      %p111 = por %p109, %p110
      %p112 = scmp.ne.s32.totalorder %s98, %s99
      %p113 = scmp.eq.s32.totalorder %s18, 1
      %p114 = por %p112, %p113
      %p116 = scmp.ne.s32.totalorder %s99, %s115
      %p117 = scmp.eq.s32.totalorder %s18, 0
      %p118 = por %p116, %p117
      %s119 = ssub.s32 %s19, %s38
      %s120 = ssub.s32 %s21, %s30
      %s121 = sor.u32 %s119, %s120
      %s122 = ssub.s32 %s20, %s34
      %s123 = sor.u32 %s121, %s122
      %p124 = scmp.eq.s32.totalorder %s123, 0
      %s126 = sadd.s32 %s125, 1
      %s127 = scalar_select %p124, %s125, %s126
      %p130 = pneg %p124
      %p131 = scmp.eq.s32.totalorder %s12, 1
      %p132 = por %p130, %p131
      %p133 = scmp.ne.s32.totalorder %s125, %s128
      %p134 = scmp.eq.s32.totalorder %s12, 0
      %p135 = por %p133, %p134
      %p136 = scmp.ne.s32.totalorder %s125, %s128
      %p137 = scmp.eq.s32.totalorder %s17, 1
      %p138 = por %p136, %p137
      %p139 = scmp.ne.s32.totalorder %s128, %s129
      %p140 = scmp.eq.s32.totalorder %s17, 0
      %p141 = por %p139, %p140
      %p142 = scmp.ne.s32.totalorder %s128, %s129
      %p143 = scmp.eq.s32.totalorder %s18, 1
      %p144 = por %p142, %p143
      %p146 = scmp.ne.s32.totalorder %s129, %s145
      %p147 = scmp.eq.s32.totalorder %s18, 0
      %p148 = por %p146, %p147
      %p149 = scmp.le.s32.totalorder 1, %s12
      %p150 = scmp.lt.s32.totalorder %s12, 3
      %p151 = pnand %p149, %p150
      %p152 = pneg %p151
      // Predicated region
      $region9: #{tpu_custom_call.1} parent=5 // pred_check
        _
      $region10: #{tpu_custom_call.1} parent=5 // pred_check_branch
        %154 = sbr.rel (%p151) target = $region12
      $region11: #{tpu_custom_call.1} parent=5 // pred_region
        %s155 = ssub.s32 %s12, 1
        // Predicated region
        $region13: #{tpu_custom_call.1} parent=11 // pred_check
          %p156 = pneg %p85
        $region14: #{tpu_custom_call.1} parent=11 // pred_check_branch
          %158 = sbr.rel (%p156) target = $region16
        $region15: #{tpu_custom_call.1} parent=11 // pred_region
          %p159 = scmp.lt.s32.totalorder %s23, 0
          %s160 = scalar_select %p159, %s23, 0
          %s161 = smul.addr %s160, 8
          %s162 = scalar_lea.vmem %s1, %s161
        $region16: #{tpu_custom_call.1} parent=11 // pred_fallthru
          _
        // Predicated region
        $region17: #{tpu_custom_call.1} parent=11 // pred_check
          %p163 = pneg %p111
        $region18: #{tpu_custom_call.1} parent=11 // pred_check_branch
          %165 = sbr.rel (%p163) target = $region20
        $region19: #{tpu_custom_call.1} parent=11 // pred_region
          %p166 = scmp.lt.s32.totalorder %s23, 0
          %s167 = scalar_select %p166, %s23, 0
          %s168 = scalar_lea.vmem %s2, %s167
        $region20: #{tpu_custom_call.1} parent=11 // pred_fallthru
          _
      $region12: #{tpu_custom_call.1} parent=5 // pred_fallthru
        _
      %p169 = scmp.lt.s32.totalorder %s12, 2
      // Predicated region
      $region21: #{tpu_custom_call.1} parent=5 // pred_check
        %p170 = pneg %p169
      $region22: #{tpu_custom_call.1} parent=5 // pred_check_branch
        %172 = sbr.rel (%p170) target = $region24
      $region23: #{tpu_custom_call.1} parent=5 // pred_region
        // Predicated region
        $region25: #{tpu_custom_call.1} parent=23 // pred_check
          %p173 = pneg %p53
        $region26: #{tpu_custom_call.1} parent=23 // pred_check_branch
          %175 = sbr.rel (%p173) target = $region28
        $region27: #{tpu_custom_call.1} parent=23 // pred_region
          %s176 = smul.u32 2, %s21
          %p177 = scmp.lt.s32.totalorder %s19, 1
          %s178 = scalar_select %p177, %s19, 1
          %p179 = scmp.lt.s32.totalorder %s176, 1
          %s180 = scalar_select %p179, %s176, 1
          %s181 = smul.addr %s178, 2
          %s182 = sadd.s32 %s180, %s181
          %s183 = smul.addr %s182, 8
          %s184 = scalar_lea.vmem %s0, %s183
          %s185 = smul.u32 2, %s21
        $region28: #{tpu_custom_call.1} parent=23 // pred_fallthru
          _
      $region24: #{tpu_custom_call.1} parent=5 // pred_fallthru
        _
      %p186 = scmp.le.s32.totalorder 1, %s12
      %p187 = scmp.lt.s32.totalorder %s12, 3
      %p188 = pnand %p186, %p187
      %p189 = pneg %p188
      // Predicated region
      $region29: #{tpu_custom_call.1} parent=5 // pred_check
        _
      $region30: #{tpu_custom_call.1} parent=5 // pred_check_branch
        %191 = sbr.rel (%p188) target = $region32
      $region31: #{tpu_custom_call.1} parent=5 // pred_region
        %s192 = ssub.s32 %s12, 1
        %s193 = smul.u32 2, %s24
        %p194 = scmp.lt.s32.totalorder %s22, 1
        %s195 = scalar_select %p194, %s22, 1
        %p196 = scmp.lt.s32.totalorder %s193, 1
        %s197 = scalar_select %p196, %s193, 1
        %s198 = smul.addr %s195, 2
        %s199 = sadd.s32 %s197, %s198
        %s200 = smul.addr %s199, 8
        %s201 = scalar_lea.vmem %s0, %s200
        %p202 = pneg %p59
        %p203 = pneg %p56
        %p204 = scmp.lt.s32.totalorder %s23, 0
        %s205 = scalar_select %p204, %s23, 0
        %s206 = smul.addr %s205, 8
        %s207 = scalar_lea.vmem %s1, %s206
        %p208 = pneg %p85
        %p209 = pneg %p82
        %p210 = scmp.lt.s32.totalorder %s23, 0
        %s211 = scalar_select %p210, %s23, 0
        %s212 = scalar_lea.vmem %s2, %s211
        %p213 = pneg %p111
        %p214 = pneg %p108
        %p215 = pneg %p141
        %p216 = pneg %p138
        %s217 = sand.u32 %s128, 1
        %s218 = scalar_lea.sflag [#allocation4], %s217
        %s219 = sand.u32 %s128, 1
        %s220 = smul.addr %s219, 16
        %s221 = scalar_lea.vmem [#allocation3], %s220
        %s222 = smul.u32 2, %s24
        %p223 = scmp.lt.s32.totalorder %s22, 1
        %s224 = scalar_select %p223, %s22, 1
        %p225 = scmp.lt.s32.totalorder %s222, 1
        %s226 = scalar_select %p225, %s222, 1
        %s227 = smul.addr %s224, 2
        %s228 = sadd.s32 %s226, %s227
        %s229 = smul.addr %s228, 8
        %s230 = scalar_lea.vmem %s0, %s229
        %s231 = smul.u32 2, %s24
        %p232 = scmp.lt.s32.totalorder %s23, 0
        %s233 = scalar_select %p232, %s23, 0
        %s234 = smul.addr %s233, 8
        %s235 = scalar_lea.vmem %s1, %s234
        %p236 = scmp.lt.s32.totalorder %s23, 0
        %s237 = scalar_select %p236, %s23, 0
        %s238 = scalar_lea.vmem %s2, %s237
        %s239 = smul.u32 2, %s24
        %v240 = vld [vmem:[%s230] sm:$0xff]
        %v241 = vld [vmem:[%s230 + $0x8] sm:$0xff]
        %p242 = scmp.eq.s32.totalorder %s24, 0
        // Predicated region
        $region33: #{tpu_custom_call.1} parent=31 // pred_check
          %p243 = pneg %p242
        $region34: #{tpu_custom_call.1} parent=31 // pred_check_branch
          %245 = sbr.rel (%p243) target = $region36
        $region35: #{tpu_custom_call.1} parent=31 // pred_region
          %vm246 = vcmask 27648
          %247 = vst.msk [vmem:[#allocation2] sm:$0xf] %vm246, 0.0
        $region36: #{tpu_custom_call.1} parent=31 // pred_fallthru
          _
        %v248 = vld [vmem:[#allocation2] sm:$0xf]
        %vm251 = vcmask 1043456
        %v252 = vrot.slane %v240, 4
        %v253 = vrot.slane %v241, 4
        %v254 = vsel %vm251, %v252, %v253
        %v258 = vsel %vm251, %v248, %v252
        %vm260 = vcmask 1041408
        %v261 = vrot.slane %v258, 6
        %v262 = vrot.slane %v254, 6
        %v263 = vsel %vm260, %v261, %v262
        %v264 = vrot.slane %v253, 6
        %v265 = vsel %vm260, %v262, %v264
        %266 = vrot.lane.b32.xlu0 %v261, 4
        %v267 = vpop.permute.xlu0 %266
        %268 = vrot.lane.b32.xlu0 %v263, 4
        %v269 = vpop.permute.xlu0 %268
        %270 = vrot.lane.b32.xlu0 %v265, 4
        %v271 = vpop.permute.xlu0 %270
        %v275 = vrot.slane %v258, 4
        %v276 = vrot.slane %v254, 4
        %v277 = vsel %vm251, %v275, %v276
        %278 = vrot.lane.b32.xlu0 %v275, 8
        %v279 = vpop.permute.xlu0 %278
        %280 = vrot.lane.b32.xlu0 %v277, 8
        %v281 = vpop.permute.xlu0 %280
        %282 = vrot.lane.b32.xlu0 %v276, 8
        %v283 = vpop.permute.xlu0 %282
        %vm287 = vcmask 31744
        %v288 = vsel %vm287, %v258, %v267
        %v289 = vsel %vm287, %v254, %v269
        %v290 = vsel %vm287, %v253, %v271
        %vm291 = vcmask 64512
        %v292 = vsel %vm291, %v288, %v279
        %v293 = vsel %vm291, %v289, %v281
        %v294 = vsel %vm291, %v290, %v283
        %v295 = vld [vmem:[%s235] sm:$0xff]
        %v296 = vld [vmem:[%s235 + $0x8] sm:$0xf]
        %v297 = vld [vmem:[%s238] sm:$0x1]
        %v299 = vlaneseq
        %v300 = vshrl.u32 %v299, 7
        %v301 = vsub.s32 0, %v300
        %v302 = vrot.slane %v297, %v301
        %v307 = vrot.slane %v292, 4
        %v308 = vrot.slane %v293, 4
        %v309 = vsel %vm251, %v307, %v308
        %v310 = vrot.slane %v294, 4
        %v311 = vsel %vm251, %v308, %v310
        %vm312 = vcmask 97280
        %v313 = vsel %vm312, %v309, 0
        %v315 = vsel %vm312, %v311, 0
        %v318 = vsel %vm251, %v296, 0
        %320 = vmatprep.subr.mxu0 0.0
        %321 = vmatpush1.msra.mxu0 0.0
        %322 = vmatprep.subr.mxu0 0.0
        %323 = vmatpush1.msra.mxu0 0.0
        %324 = vmatprep.subr.mxu0 0.0
        %325 = vmatpush1.msra.mxu0 0.0
        %326 = vmatprep.subr.mxu0 0.0
        %327 = vmatpush1.msra.mxu0 0.0
        %328 = vmatprep.subr.mxu0 0.0
        %329 = vmatpush1.msra.mxu0 0.0
        %330 = vmatprep.subr.mxu0 0.0
        %331 = vmatpush1.msra.mxu0 0.0
        %332 = vmatprep.subr.mxu0 0.0
        %333 = vmatpush1.msra.mxu0 0.0
        %334 = vmatprep.subr.mxu0 0.0
        %335 = vmatpush1.msra.mxu0 0.0
        %336 = vmatprep.subr.mxu0 0.0
        %337 = vmatpush1.msra.mxu0 0.0
        %338 = vmatprep.subr.mxu0 0.0
        %339 = vmatpush1.msra.mxu0 0.0
        %340 = vmatprep.subr.mxu0 0.0
        %341 = vmatpush1.msra.mxu0 0.0
        %342 = vmatprep.subr.mxu0 0.0
        %343 = vmatpush1.msra.mxu0 0.0
        %344 = vmatprep.subr.mxu0 0.0
        %345 = vmatpush1.msra.mxu0 0.0
        %346 = vmatprep.subr.mxu0 0.0
        %347 = vmatpush1.msra.mxu0 0.0
        %348 = vmatprep.subr.mxu0 0.0
        %349 = vmatpush1.msra.mxu0 %v318
        %350 = vmatprep.subr.mxu0 0.0
        %351 = vmatpush1.msra.mxu0 %v295
        %352 = vmatprep.subr.mxu0 0.0
        %353 = vmatpush2.msra.mxu0 0.0
        %354 = vmatprep.subr.mxu0 0.0
        %355 = vmatpush2.msra.mxu0 0.0
        %356 = vmatprep.subr.mxu0 0.0
        %357 = vmatpush2.msra.mxu0 0.0
        %358 = vmatprep.subr.mxu0 0.0
        %359 = vmatpush2.msra.mxu0 0.0
        %360 = vmatprep.subr.mxu0 0.0
        %361 = vmatpush2.msra.mxu0 0.0
        %362 = vmatprep.subr.mxu0 0.0
        %363 = vmatpush2.msra.mxu0 0.0
        %364 = vmatprep.subr.mxu0 0.0
        %365 = vmatpush2.msra.mxu0 0.0
        %366 = vmatprep.subr.mxu0 0.0
        %367 = vmatpush2.msra.mxu0 0.0
        %368 = vmatprep.subr.mxu0 0.0
        %369 = vmatpush2.msra.mxu0 0.0
        %370 = vmatprep.subr.mxu0 0.0
        %371 = vmatpush2.msra.mxu0 0.0
        %372 = vmatprep.subr.mxu0 0.0
        %373 = vmatpush2.msra.mxu0 0.0
        %374 = vmatprep.subr.mxu0 0.0
        %375 = vmatpush2.msra.mxu0 0.0
        %376 = vmatprep.subr.mxu0 0.0
        %377 = vmatpush2.msra.mxu0 0.0
        %378 = vmatprep.subr.mxu0 0.0
        %379 = vmatpush2.msra.mxu0 0.0
        %380 = vmatprep.subr.mxu0 0.0
        %381 = vmatpush2.msra.mxu0 0.0
        %382 = vmatprep.subr.mxu0 0.0
        %383 = vmatpush2.msra.mxu0 0.0
        %384 = vmatprep.mubr.f32.mxu0 0.0
        %385 = vmatmul.mubr.f32.gmra.mxu0 %v313
        %v386 = vpop.f32.mrf.mxu0
        %v387 = vadd.f32 %v302, %v386
        %v388 = vpop.f32.mrf.mxu0
        %389 = vmatprep.mubr.f32.mxu0 0.0
        %390 = vmatmul.mubr.f32.gmra.mxu0 %v315
        %v391 = vpop.f32.mrf.mxu0
        %v392 = vadd.f32 %v302, %v391
        %v393 = vpop.f32.mrf.mxu0
        %394 = vdwg.mxu0
        %395 = vst [vmem:[%s221] sm:$0xff] %v387
        %396 = vst [vmem:[%s221 + $0x8] sm:$0xff] %v392
        %vm397 = vcmask 31748
        %398 = vst.msk [vmem:[#allocation2 - $0x4] sm:$0xf0] %vm397, %v241
        %s399 = sand.u32 %s128, 1
        %s400 = scalar_lea.sflag [#allocation4], %s399
        %s401 = sand.u32 %s128, 1
        %s402 = smul.addr %s401, 16
        %s403 = scalar_lea.vmem [#allocation3], %s402
        // Predicated region
        $region37: #{tpu_custom_call.1} parent=31 // pred_check
          %p404 = pneg %p138
        $region38: #{tpu_custom_call.1} parent=31 // pred_check_branch
          %406 = sbr.rel (%p404) target = $region40
        $region39: #{tpu_custom_call.1} parent=31 // pred_region
          %s407 = smul.u32 2, %s24
          %s409 = ssub.s32 256, 256
          %410 = vsyncadd %s400, %s409
          %s411 = sadd.s32 %s23, %s407
          %s412 = smul.addr %s22, 2
          %s413 = sadd.s32 %s411, %s412
          %s414 = smul.addr %s413, 128
          %s415 = scalar_lea.hbm %s3, %s414
          %s416 = sshll.u32 %s403, 4
          %s417 = int_to_ptr.vmem [resolvable:$true] %s416
          %422 = dma.vmem_to_hbm [thread:$0]  %s417, 256, %s415, %s400, 128, 128, 8
        $region40: #{tpu_custom_call.1} parent=31 // pred_fallthru
          _
      $region32: #{tpu_custom_call.1} parent=5 // pred_fallthru
        _
      %p423 = scmp.le.s32.totalorder 2, %s12
      // Predicated region
      $region41: #{tpu_custom_call.1} parent=5 // pred_check
        %p424 = pneg %p423
      $region42: #{tpu_custom_call.1} parent=5 // pred_check_branch
        %426 = sbr.rel (%p424) target = $region44
      $region43: #{tpu_custom_call.1} parent=5 // pred_region
        %s427 = ssub.s32 %s12, 2
        // Predicated region
        $region45: #{tpu_custom_call.1} parent=43 // pred_check
          %p428 = pneg %p144
        $region46: #{tpu_custom_call.1} parent=43 // pred_check_branch
          %430 = sbr.rel (%p428) target = $region48
        $region47: #{tpu_custom_call.1} parent=43 // pred_region
          %s431 = sand.u32 %s129, 1
          %s432 = scalar_lea.sflag [#allocation4], %s431
          %s433 = sand.u32 %s129, 1
          %s434 = smul.addr %s433, 16
          %s435 = scalar_lea.vmem [#allocation3], %s434
          %436 = dma.done %s432, 256
        $region48: #{tpu_custom_call.1} parent=43 // pred_fallthru
          _
      $region44: #{tpu_custom_call.1} parent=5 // pred_fallthru
        _
    $region6: #{tpu_custom_call.1} parent=1 // loop_footer
      %s16 = sadd.s32 1, %s12
    $region7: #{tpu_custom_call.1} parent=1 // loop_footer_branch
      %11 = sbr.rel target = $region3
    $region8: #{tpu_custom_call.1} parent=1 // loop_exit
      _
    %437 = vsyncpa [#allocation4], 1
    %s438 = scalar_lea.sflag [#allocation4], 1
    %439 = vsyncpa %s438, 1

</llo_original>
